<compile_context>
chip_gen: v7x
topology: tpu7x:2x2x1
jax: 0.10.0
libtpu: 0.0.40
codegen_flags: <defaults>
</compile_context>

<pallas_src>
import functools

import jax
import jax.numpy as jnp
from jax import lax
from jax.experimental import pallas as pl
from jax.experimental.pallas import tpu as pltpu

LANES = 128
SUBLANES = 8
ALIGN = SUBLANES * LANES           # 1024 elements
MAX_BLOCK_ROWS = 8192              # (8192, 128) f32 block = 4 MiB per input


def _dice_partials_kernel(out_ref, tgt_ref, inter_ref, sum_ref, *,
                          n_valid, block_rows):
    """Per-block partial sums: inter = sum(sigmoid(x)*t), total = sum(sigmoid(x)+t)."""
    i = pl.program_id(0)
    block_elems = block_rows * LANES
    block_start = i * block_elems

    o = jax.nn.sigmoid(out_ref[...].astype(jnp.float32))
    t = tgt_ref[...].astype(jnp.float32)

    def write_partials(o_v, t_v):
        # Reduce the (block_rows, 128) block to an (8, 128) partial with pure
        # vreg-wise VPU adds (the reshape only groups whole (8,128) tiles, so
        # it is layout-free).  The expensive cross-lane (XLU) reduction is
        # deferred to the wrapper and paid once per call.
        inter_ref[0] = (o_v * t_v).reshape(
            block_rows // SUBLANES, SUBLANES, LANES).sum(axis=0)
        sum_ref[0] = (o_v + t_v).reshape(
            block_rows // SUBLANES, SUBLANES, LANES).sum(axis=0)

    # Hot path: block lies entirely inside the valid prefix -> no masking.
    @pl.when(block_start + block_elems <= n_valid)
    def _():
        write_partials(o, t)

    # Cold path (at most one block per call): block straddles the end of the
    # valid data (rows % block_rows != 0); mask by global element index so
    # the uninitialized remainder of the partial block contributes nothing.
    @pl.when(block_start + block_elems > n_valid)
    def _():
        row = lax.broadcasted_iota(jnp.int32, (block_rows, LANES), 0)
        lane = lax.broadcasted_iota(jnp.int32, (block_rows, LANES), 1)
        mask = (block_start + row * LANES + lane) < n_valid
        write_partials(jnp.where(mask, o, 0.0), jnp.where(mask, t, 0.0))


def dice_loss(output, target, smooth=1e-07, max_block_rows=MAX_BLOCK_ROWS):
    """Pallas implementation of DiceLoss.forward (returns scalar f32)."""
    assert output.shape == target.shape
    n = int(output.size)

    # Flatten exactly like .view(-1); metadata-only for contiguous arrays.
    out_flat = output.reshape(-1)
    tgt_flat = target.reshape(-1)

    n_main = (n // ALIGN) * ALIGN

    # <= 1023-element ragged tail: reduce with plain jnp in the wrapper,
    # avoiding a full-array pad copy when n is not 1024-aligned.
    if n_main != n:
        o_tail = jax.nn.sigmoid(out_flat[n_main:].astype(jnp.float32))
        t_tail = tgt_flat[n_main:].astype(jnp.float32)
        inter_tail = jnp.sum(o_tail * t_tail)
        total_tail = jnp.sum(o_tail) + jnp.sum(t_tail)
    else:
        inter_tail = jnp.float32(0.0)
        total_tail = jnp.float32(0.0)

    if n_main == 0:
        dice = (2.0 * inter_tail + smooth) / (total_tail + smooth)
        return (1.0 - dice).astype(jnp.float32)

    if n_main != n:
        out_main = out_flat[:n_main]
        tgt_main = tgt_flat[:n_main]
    else:
        out_main = out_flat
        tgt_main = tgt_flat

    rows = n_main // LANES                      # multiple of 8 by construction
    block_rows = min(max_block_rows, rows)
    nblocks = pl.cdiv(rows, block_rows)

    out2d = out_main.reshape(rows, LANES)
    tgt2d = tgt_main.reshape(rows, LANES)

    cost = pl.CostEstimate(
        flops=5 * n_main,
        transcendentals=n_main,
        bytes_accessed=(n_main * (output.dtype.itemsize + target.dtype.itemsize)
                        + nblocks * 2 * SUBLANES * LANES * 4),
    )

    kernel = functools.partial(
        _dice_partials_kernel, n_valid=n_main, block_rows=block_rows)

    inter_parts, sum_parts = pl.pallas_call(
        kernel,
        out_shape=(
            jax.ShapeDtypeStruct((nblocks, SUBLANES, LANES), jnp.float32),
            jax.ShapeDtypeStruct((nblocks, SUBLANES, LANES), jnp.float32),
        ),
        grid_spec=pltpu.PrefetchScalarGridSpec(
            num_scalar_prefetch=0,
            grid=(nblocks,),
            in_specs=[
                pl.BlockSpec((block_rows, LANES), lambda i: (i, 0)),
                pl.BlockSpec((block_rows, LANES), lambda i: (i, 0)),
            ],
            out_specs=(
                pl.BlockSpec((1, SUBLANES, LANES), lambda i: (i, 0, 0)),
                pl.BlockSpec((1, SUBLANES, LANES), lambda i: (i, 0, 0)),
            ),
        ),
        compiler_params=pltpu.CompilerParams(
            dimension_semantics=("parallel",),
            vmem_limit_bytes=40 * 1024 * 1024,
        ),
        cost_estimate=cost,
    )(out2d, tgt2d)

    inter = jnp.sum(inter_parts) + inter_tail
    total = jnp.sum(sum_parts) + total_tail
    dice = (2.0 * inter + smooth) / (total + smooth)
    return (1.0 - dice).astype(jnp.float32)


def dice_loss_ref(output, target, smooth=1e-07):
    o = jax.nn.sigmoid(output.astype(jnp.float32)).reshape(-1)
    t = target.astype(jnp.float32).reshape(-1)
    inter = jnp.sum(o * t)
    dice = (2.0 * inter + smooth) / (jnp.sum(o) + jnp.sum(t) + smooth)
    return 1.0 - dice


if __name__ == "__main__":
    key = jax.random.PRNGKey(0)
    k1, k2, k3, k4, k5, k6 = jax.random.split(key, 6)

    # NCHW, like the PyTorch segmentation setting.
    x_shape = (2, 4, 16, 16)
    logits = jax.random.normal(k1, x_shape, dtype=jnp.float32)
    target = (jax.random.uniform(k2, x_shape) > 0.5).astype(jnp.float32)

    loss = jax.block_until_ready(dice_loss(logits, target))
    ref = dice_loss_ref(logits, target)
    assert jnp.allclose(loss, ref, atol=1e-5, rtol=1e-5), (loss, ref)

    # Non-1024-aligned element count: exercises the wrapper tail path.
    y_shape = (3, 5, 7, 11)  # 1155 elements
    logits2 = jax.random.normal(k3, y_shape, dtype=jnp.float32)
    target2 = (jax.random.uniform(k4, y_shape) > 0.5).astype(jnp.float32)
    loss2 = jax.block_until_ready(dice_loss(logits2, target2))
    ref2 = dice_loss_ref(logits2, target2)
    assert jnp.allclose(loss2, ref2, atol=1e-5, rtol=1e-5), (loss2, ref2)

    # Multi-block grid + straddling (masked) last block + tail, via a small
    # max_block_rows override: 3168 elems -> 24 valid rows, 16-row blocks.
    z_shape = (1, 3, 32, 33)
    logits3 = jax.random.normal(k5, z_shape, dtype=jnp.float32)
    target3 = (jax.random.uniform(k6, z_shape) > 0.5).astype(jnp.float32)
    loss3 = jax.block_until_ready(dice_loss(logits3, target3, max_block_rows=16))
    ref3 = dice_loss_ref(logits3, target3)
    assert jnp.allclose(loss3, ref3, atol=1e-5, rtol=1e-5), (loss3, ref3)

    print("KERNEL_OK")
</pallas_src>

<mosaic_0001>
module attributes {stable_mosaic.version = 11 : i64} {
  func.func @_dice_partials_kernel(%arg0: i32, %arg1: memref<16x128xf32, #tpu.memory_space<vmem>>, %arg2: memref<16x128xf32, #tpu.memory_space<vmem>>, %arg3: memref<1x8x128xf32, #tpu.memory_space<vmem>>, %arg4: memref<1x8x128xf32, #tpu.memory_space<vmem>>) attributes {dimension_semantics = [#tpu.dimension_semantics<parallel>], iteration_bounds = array<i64: 1>, scalar_prefetch = 0 : i64, scratch_operands = 0 : i64, tpu.core_type = #tpu.core_type<tc>, window_params = [{transform_indices = @transform_0, window_bounds = array<i64: 16, 128>}, {transform_indices = @transform_1, window_bounds = array<i64: 16, 128>}, {transform_indices = @transform_2, window_bounds = array<i64: 1, 8, 128>}, {transform_indices = @transform_3, window_bounds = array<i64: 1, 8, 128>}]} {
    %c2048_i32 = arith.constant 2048 : i32
    %0 = arith.muli %arg0, %c2048_i32 : i32
    %c0 = arith.constant 0 : index
    %c0_0 = arith.constant 0 : index
    %1 = vector.load %arg1[%c0, %c0_0] : memref<16x128xf32, #tpu.memory_space<vmem>>, vector<16x128xf32>
    %2 = arith.negf %1 : vector<16x128xf32>
    %3 = math.exp %2 : vector<16x128xf32>
    %cst = arith.constant 1.000000e+00 : f32
    %4 = vector.broadcast %cst : f32 to vector<16x128xf32>
    %5 = arith.addf %4, %3 : vector<16x128xf32>
    %6 = arith.divf %4, %5 : vector<16x128xf32>
    %c0_1 = arith.constant 0 : index
    %c0_2 = arith.constant 0 : index
    %7 = vector.load %arg2[%c0_1, %c0_2] : memref<16x128xf32, #tpu.memory_space<vmem>>, vector<16x128xf32>
    %c2048_i32_3 = arith.constant 2048 : i32
    %8 = arith.addi %0, %c2048_i32_3 : i32
    %c2048_i32_4 = arith.constant 2048 : i32
    %9 = arith.cmpi sle, %8, %c2048_i32_4 : i32
    %10 = arith.extui %9 : i1 to i32
    %c0_i32 = arith.constant 0 : i32
    %11 = arith.cmpi ne, %10, %c0_i32 : i32
    scf.if %11 {
      %16 = arith.mulf %6, %7 : vector<16x128xf32>
      %17 = vector.shape_cast %16 : vector<16x128xf32> to vector<2x8x128xf32>
      %cst_8 = arith.constant dense<0.000000e+00> : vector<8x128xf32>
      %18 = vector.multi_reduction <add>, %17, %cst_8 [0] : vector<2x8x128xf32> to vector<8x128xf32>
      %c0_9 = arith.constant 0 : index
      %c0_10 = arith.constant 0 : index
      %c0_11 = arith.constant 0 : index
      %19 = vector.load %arg3[%c0_9, %c0_10, %c0_11] : memref<1x8x128xf32, #tpu.memory_space<vmem>>, vector<1x8x128xf32>
      %20 = vector.shape_cast %19 : vector<1x8x128xf32> to vector<8x128xf32>
      %21 = vector.shape_cast %18 : vector<8x128xf32> to vector<1x8x128xf32>
      tpu.vector_store %arg3[%c0_9, %c0_10, %c0_11], %21 {strides = array<i32>} : memref<1x8x128xf32, #tpu.memory_space<vmem>>, vector<1x8x128xf32>,
      %22 = arith.addf %6, %7 : vector<16x128xf32>
      %23 = vector.shape_cast %22 : vector<16x128xf32> to vector<2x8x128xf32>
      %cst_12 = arith.constant dense<0.000000e+00> : vector<8x128xf32>
      %24 = vector.multi_reduction <add>, %23, %cst_12 [0] : vector<2x8x128xf32> to vector<8x128xf32>
      %c0_13 = arith.constant 0 : index
      %c0_14 = arith.constant 0 : index
      %c0_15 = arith.constant 0 : index
      %25 = vector.load %arg4[%c0_13, %c0_14, %c0_15] : memref<1x8x128xf32, #tpu.memory_space<vmem>>, vector<1x8x128xf32>
      %26 = vector.shape_cast %25 : vector<1x8x128xf32> to vector<8x128xf32>
      %27 = vector.shape_cast %24 : vector<8x128xf32> to vector<1x8x128xf32>
      tpu.vector_store %arg4[%c0_13, %c0_14, %c0_15], %27 {strides = array<i32>} : memref<1x8x128xf32, #tpu.memory_space<vmem>>, vector<1x8x128xf32>,
    } else {
    }
    %c2048_i32_5 = arith.constant 2048 : i32
    %12 = arith.addi %0, %c2048_i32_5 : i32
    %c2048_i32_6 = arith.constant 2048 : i32
    %13 = arith.cmpi sgt, %12, %c2048_i32_6 : i32
    %14 = arith.extui %13 : i1 to i32
    %c0_i32_7 = arith.constant 0 : i32
    %15 = arith.cmpi ne, %14, %c0_i32_7 : i32
    scf.if %15 {
      %16 = tpu.iota {dimensions = array<i32: 0>} : vector<16x128xi32>
      %17 = tpu.iota {dimensions = array<i32: 1>} : vector<16x128xi32>
      %c128_i32 = arith.constant 128 : i32
      %18 = vector.broadcast %c128_i32 : i32 to vector<16x128xi32>
      %19 = arith.muli %16, %18 : vector<16x128xi32>
      %20 = vector.broadcast %0 : i32 to vector<16x128xi32>
      %21 = arith.addi %20, %19 : vector<16x128xi32>
      %22 = arith.addi %21, %17 : vector<16x128xi32>
      %c2048_i32_8 = arith.constant 2048 : i32
      %23 = vector.broadcast %c2048_i32_8 : i32 to vector<16x128xi32>
      %24 = arith.cmpi slt, %22, %23 : vector<16x128xi32>
      %cst_9 = arith.constant 0.000000e+00 : f32
      %25 = vector.broadcast %cst_9 : f32 to vector<16x128xf32>
      %26 = arith.select %24, %6, %25 : vector<16x128xi1>, vector<16x128xf32>
      %cst_10 = arith.constant 0.000000e+00 : f32
      %27 = vector.broadcast %cst_10 : f32 to vector<16x128xf32>
      %28 = arith.select %24, %7, %27 : vector<16x128xi1>, vector<16x128xf32>
      %29 = arith.mulf %26, %28 : vector<16x128xf32>
      %30 = vector.shape_cast %29 : vector<16x128xf32> to vector<2x8x128xf32>
      %cst_11 = arith.constant dense<0.000000e+00> : vector<8x128xf32>
      %31 = vector.multi_reduction <add>, %30, %cst_11 [0] : vector<2x8x128xf32> to vector<8x128xf32>
      %c0_12 = arith.constant 0 : index
      %c0_13 = arith.constant 0 : index
      %c0_14 = arith.constant 0 : index
      %32 = vector.load %arg3[%c0_12, %c0_13, %c0_14] : memref<1x8x128xf32, #tpu.memory_space<vmem>>, vector<1x8x128xf32>
      %33 = vector.shape_cast %32 : vector<1x8x128xf32> to vector<8x128xf32>
      %34 = vector.shape_cast %31 : vector<8x128xf32> to vector<1x8x128xf32>
      tpu.vector_store %arg3[%c0_12, %c0_13, %c0_14], %34 {strides = array<i32>} : memref<1x8x128xf32, #tpu.memory_space<vmem>>, vector<1x8x128xf32>,
      %35 = arith.addf %26, %28 : vector<16x128xf32>
      %36 = vector.shape_cast %35 : vector<16x128xf32> to vector<2x8x128xf32>
      %cst_15 = arith.constant dense<0.000000e+00> : vector<8x128xf32>
      %37 = vector.multi_reduction <add>, %36, %cst_15 [0] : vector<2x8x128xf32> to vector<8x128xf32>
      %c0_16 = arith.constant 0 : index
      %c0_17 = arith.constant 0 : index
      %c0_18 = arith.constant 0 : index
      %38 = vector.load %arg4[%c0_16, %c0_17, %c0_18] : memref<1x8x128xf32, #tpu.memory_space<vmem>>, vector<1x8x128xf32>
      %39 = vector.shape_cast %38 : vector<1x8x128xf32> to vector<8x128xf32>
      %40 = vector.shape_cast %37 : vector<8x128xf32> to vector<1x8x128xf32>
      tpu.vector_store %arg4[%c0_16, %c0_17, %c0_18], %40 {strides = array<i32>} : memref<1x8x128xf32, #tpu.memory_space<vmem>>, vector<1x8x128xf32>,
    } else {
    }
    return
  }
  func.func @transform_0(%arg0: i32) -> (i32, i32) {
    %c0_i32 = arith.constant 0 : i32
    %c0_i32_0 = arith.constant 0 : i32
    return %arg0, %c0_i32 : i32, i32
  }
  func.func @transform_1(%arg0: i32) -> (i32, i32) {
    %c0_i32 = arith.constant 0 : i32
    %c0_i32_0 = arith.constant 0 : i32
    return %arg0, %c0_i32 : i32, i32
  }
  func.func @transform_2(%arg0: i32) -> (i32, i32, i32) {
    %c0_i32 = arith.constant 0 : i32
    %c0_i32_0 = arith.constant 0 : i32
    %c0_i32_1 = arith.constant 0 : i32
    return %arg0, %c0_i32, %c0_i32_0 : i32, i32, i32
  }
  func.func @transform_3(%arg0: i32) -> (i32, i32, i32) {
    %c0_i32 = arith.constant 0 : i32
    %c0_i32_0 = arith.constant 0 : i32
    %c0_i32_1 = arith.constant 0 : i32
    return %arg0, %c0_i32, %c0_i32_0 : i32, i32, i32
  }
}

</mosaic_0001>

<llo_original>
// kernel: tpu_custom_call.1
$region0: #{tpu_custom_call.1}
  #allocation0 [shape = 'u32[]', space=smem, size = 0x4, offset = 0x4, fixed_abs, tag = 'smem constant byte address 0x4 - core index']
  #allocation1 [shape = 'u32[144,128]{1,0:T(1,128)}', space=vmem, size = 0x12000, scoped, tag = 'internal scratch']
  %s0 = inlined_call_operand.hbm [shape: f32[16,128], index: 0, kind: input, shape index: {}]
  %s1 = inlined_call_operand.hbm [shape: f32[16,128], index: 1, kind: input, shape index: {}]
  %s2 = inlined_call_operand.hbm [shape: f32[1,8,128], index: 2, kind: output, shape index: {0}]
  %s3 = inlined_call_operand.hbm [shape: f32[1,8,128], index: 3, kind: output, shape index: {1}]
  %4 = xla_tuple %s2, %s3
  %s5 = sld [smem:[#allocation0]]
  $region42: #{tpu_custom_call.1} parent=0
    _
  %s7 = ssub.s32 1, %s5
  %s8 = scalar_select 0, %s7, %s5
  $region1: #{tpu_custom_call.1} parent=0
    #allocation2 [shape = 'u8[8192]{0}', space=vmem, size = 0x2000, scoped, tag = 'input window, operand 0, single buffered']
    #allocation3 [shape = 's32[1]{0}', space=sflag, size = 0x4, scoped, tag = 'scoped memory for tpu_custom_call.1']
    #allocation4 [shape = 's32[1]{0}', space=sflag, size = 0x4, scoped, tag = 'scoped memory for tpu_custom_call.1']
    #allocation5 [shape = 'u8[8192]{0}', space=vmem, size = 0x2000, scoped, tag = 'input window, operand 1, single buffered']
    #allocation6 [shape = 's32[1]{0}', space=sflag, size = 0x4, scoped, tag = 'scoped memory for tpu_custom_call.1']
    #allocation7 [shape = 'u8[4096]{0}', space=vmem, size = 0x1000, scoped, tag = 'output window, operand 0, single buffered']
    #allocation8 [shape = 'u8[4096]{0}', space=vmem, size = 0x1000, scoped, tag = 'output window, operand 1, single buffered']
    #allocation9 [shape = 's32[1]{0}', space=sflag, size = 0x4, scoped, tag = 'scoped memory for tpu_custom_call.1']
    %9 = vsyncpa [#allocation3], 0
    %10 = vsyncpa [#allocation6], 0
    %11 = vsyncpa [#allocation4], 0
    %12 = vsyncpa [#allocation9], 0
    // Predicated region
    $region2: #{tpu_custom_call.1} parent=1 // pred_check
      _
    $region3: #{tpu_custom_call.1} parent=1 // pred_check_branch
      %14 = sbr.rel (0) target = $region5
    $region4: #{tpu_custom_call.1} parent=1 // pred_region
      %s16 = ssub.s32 256, 256
      %17 = vsyncadd [#allocation3], %s16
      %s18 = sshll.u32 [#allocation2], 4
      %s19 = int_to_ptr.vmem [resolvable:$true] %s18
      %24 = dma.hbm_to_vmem [thread:$0]  %s0, 256, %s19, [#allocation3], 128, 128, 8
    $region5: #{tpu_custom_call.1} parent=1 // pred_fallthru
      _
    // Predicated region
    $region6: #{tpu_custom_call.1} parent=1 // pred_check
      _
    $region7: #{tpu_custom_call.1} parent=1 // pred_check_branch
      %26 = sbr.rel (0) target = $region9
    $region8: #{tpu_custom_call.1} parent=1 // pred_region
      %s28 = ssub.s32 256, 256
      %29 = vsyncadd [#allocation6], %s28
      %s30 = sshll.u32 [#allocation5], 4
      %s31 = int_to_ptr.vmem [resolvable:$true] %s30
      %36 = dma.hbm_to_vmem [thread:$0]  %s1, 256, %s31, [#allocation6], 128, 128, 8
    $region9: #{tpu_custom_call.1} parent=1 // pred_fallthru
      _
    // Predicated region
    $region10: #{tpu_custom_call.1} parent=1 // pred_check
      _
    $region11: #{tpu_custom_call.1} parent=1 // pred_check_branch
      %38 = sbr.rel (0) target = $region13
    $region12: #{tpu_custom_call.1} parent=1 // pred_region
      %39 = dma.done [#allocation3], 256
    $region13: #{tpu_custom_call.1} parent=1 // pred_fallthru
      _
    // Predicated region
    $region14: #{tpu_custom_call.1} parent=1 // pred_check
      _
    $region15: #{tpu_custom_call.1} parent=1 // pred_check_branch
      %41 = sbr.rel (0) target = $region17
    $region16: #{tpu_custom_call.1} parent=1 // pred_region
      %42 = dma.done [#allocation6], 256
    $region17: #{tpu_custom_call.1} parent=1 // pred_fallthru
      _
    %s43 = smul.u32 0, 2048
    %v44 = vld [vmem:[#allocation2] sm:$0xff]
    %v45 = vld [vmem:[#allocation2 + $0x8] sm:$0xff]
    %v46 = vxor.u32 %v44, 2147483648
    %v47 = vxor.u32 %v45, 2147483648
    %v48 = vmul.f32 %v46, 1.442695
    %v49 = vpow.pop %v48
    %v50 = vmul.f32 %v47, 1.442695
    %v51 = vpow.pop %v50
    %v52 = vadd.f32 %v49, 1.0
    %v53 = vadd.f32 %v51, 1.0
    %v54 = vrcp.pop %v52
    %v55 = vmul.f32 1.0, %v54
    %v56 = vrcp.pop %v53
    %v57 = vmul.f32 1.0, %v56
    %v58 = vld [vmem:[#allocation5] sm:$0xff]
    %v59 = vld [vmem:[#allocation5 + $0x8] sm:$0xff]
    %s60 = sadd.s32 %s43, 2048
    %p61 = scmp.le.s32.totalorder %s60, 2048
    // Predicated region
    $region18: #{tpu_custom_call.1} parent=1 // pred_check
      %p62 = pneg %p61
    $region19: #{tpu_custom_call.1} parent=1 // pred_check_branch
      %64 = sbr.rel (%p62) target = $region21
    $region20: #{tpu_custom_call.1} parent=1 // pred_region
      %v65 = vmul.f32 %v55, %v58
      %v66 = vmul.f32 %v57, %v59
      %v67 = vadd.f32 %v65, %v66
      %68 = vst [vmem:[#allocation7] sm:$0xff] %v67
      %v69 = vadd.f32 %v55, %v58
      %v70 = vadd.f32 %v57, %v59
      %v71 = vadd.f32 %v69, %v70
      %72 = vst [vmem:[#allocation8] sm:$0xff] %v71
    $region21: #{tpu_custom_call.1} parent=1 // pred_fallthru
      _
    %p73 = scmp.gt.s32.totalorder %s60, 2048
    // Predicated region
    $region22: #{tpu_custom_call.1} parent=1 // pred_check
      %p74 = pneg %p73
    $region23: #{tpu_custom_call.1} parent=1 // pred_check_branch
      %76 = sbr.rel (%p74) target = $region25
    $region24: #{tpu_custom_call.1} parent=1 // pred_region
      %v77 = vlaneseq
      %v78 = vshrl.u32 %v77, 7
      %v79 = vadd.s32 %v78, 8
      %v80 = vlaneseq
      %v81 = vand.u32 %v80, 127
      %v82 = vmul.u32 %v78, 128
      %v83 = vmul.u32 %v79, 128
      %v84 = vstv %s43
      %v85 = vadd.s32 %v84, %v82
      %v86 = vadd.s32 %v84, %v83
      %v87 = vadd.s32 %v85, %v81
      %v88 = vadd.s32 %v86, %v81
      %vm89 = vcmp.lt.s32.totalorder %v87, 2048
      %vm90 = vcmp.lt.s32.totalorder %v88, 2048
      %v91 = vsel %vm89, %v55, 0.0
      %v92 = vsel %vm90, %v57, 0.0
      %v93 = vsel %vm89, %v58, 0.0
      %v94 = vsel %vm90, %v59, 0.0
      %v95 = vmul.f32 %v91, %v93
      %v96 = vmul.f32 %v92, %v94
      %v97 = vadd.f32 %v95, %v96
      %98 = vst [vmem:[#allocation7] sm:$0xff] %v97
      %v99 = vadd.f32 %v91, %v93
      %v100 = vadd.f32 %v92, %v94
      %v101 = vadd.f32 %v99, %v100
      %102 = vst [vmem:[#allocation8] sm:$0xff] %v101
    $region25: #{tpu_custom_call.1} parent=1 // pred_fallthru
      _
    // Predicated region
    $region26: #{tpu_custom_call.1} parent=1 // pred_check
      _
    $region27: #{tpu_custom_call.1} parent=1 // pred_check_branch
      %104 = sbr.rel (0) target = $region29
    $region28: #{tpu_custom_call.1} parent=1 // pred_region
      %s106 = ssub.s32 128, 128
      %107 = vsyncadd [#allocation4], %s106
      %s109 = sshll.u32 [#allocation7], 4
      %s110 = int_to_ptr.vmem [resolvable:$true] %s109
      %112 = dma.vmem_to_hbm [thread:$0]  %s110, 128, %s2, [#allocation4]
    $region29: #{tpu_custom_call.1} parent=1 // pred_fallthru
      _
    // Predicated region
    $region30: #{tpu_custom_call.1} parent=1 // pred_check
      _
    $region31: #{tpu_custom_call.1} parent=1 // pred_check_branch
      %114 = sbr.rel (0) target = $region33
    $region32: #{tpu_custom_call.1} parent=1 // pred_region
      %s116 = ssub.s32 128, 128
      %117 = vsyncadd [#allocation9], %s116
      %s119 = sshll.u32 [#allocation8], 4
      %s120 = int_to_ptr.vmem [resolvable:$true] %s119
      %122 = dma.vmem_to_hbm [thread:$0]  %s120, 128, %s3, [#allocation9]
    $region33: #{tpu_custom_call.1} parent=1 // pred_fallthru
      _
    // Predicated region
    $region34: #{tpu_custom_call.1} parent=1 // pred_check
      _
    $region35: #{tpu_custom_call.1} parent=1 // pred_check_branch
      %124 = sbr.rel (0) target = $region37
    $region36: #{tpu_custom_call.1} parent=1 // pred_region
      %125 = dma.done [#allocation4], 128
    $region37: #{tpu_custom_call.1} parent=1 // pred_fallthru
      _
    // Predicated region
    $region38: #{tpu_custom_call.1} parent=1 // pred_check
      _
    $region39: #{tpu_custom_call.1} parent=1 // pred_check_branch
      %127 = sbr.rel (0) target = $region41
    $region40: #{tpu_custom_call.1} parent=1 // pred_region
      %128 = dma.done [#allocation9], 128
    $region41: #{tpu_custom_call.1} parent=1 // pred_fallthru
      _
    %129 = vsyncpa [#allocation3], 1
    %130 = vsyncpa [#allocation6], 1
    %131 = vsyncpa [#allocation4], 1
    %132 = vsyncpa [#allocation9], 1

</llo_original>
